<compile_context>
chip_gen: v6e
topology: v6e:2x2x1
jax: 0.10.0
libtpu: 0.0.40
codegen_flags: <defaults>
</compile_context>

<pallas_src>
import functools
import math

import jax
import jax.numpy as jnp
from jax.experimental import pallas as pl
from jax.experimental.pallas import tpu as pltpu

LANES = 128
SUBLANES = 8
MAX_BLOCK_ROWS = 4096   # (4096, 128) f32 = 2 MiB per input block
STRIP_ROWS = 512        # rows per in-kernel reduction strip


def _reduce_rows(logits_ref, targets_ref, nrows):
    """Sum sigmoid(x)*t and sigmoid(x)+t over the first `nrows` rows.

    `nrows` is a static Python int (a multiple of 8).  Returns two (1, 128)
    lane-partial f32 sums.  Strip-mined so the live set stays small.
    """

    def strip_sums(row_start, srows, carry):
        inter, total = carry
        x = logits_ref[pl.ds(row_start, srows), :].astype(jnp.float32)
        t = targets_ref[pl.ds(row_start, srows), :].astype(jnp.float32)
        # sigmoid(x) == 0.5 * (tanh(0.5 * x) + 1): single EUP op per element.
        p = 0.5 * (jnp.tanh(0.5 * x) + 1.0)
        inter = inter + jnp.sum(p * t, axis=0, keepdims=True)
        total = total + jnp.sum(p + t, axis=0, keepdims=True)
        return inter, total

    carry = (jnp.zeros((1, LANES), jnp.float32),
             jnp.zeros((1, LANES), jnp.float32))

    n_strips, rem = divmod(nrows, STRIP_ROWS)
    if n_strips > 0:
        def body(s, c):
            start = pl.multiple_of(s * STRIP_ROWS, STRIP_ROWS)
            return strip_sums(start, STRIP_ROWS, c)
        carry = jax.lax.fori_loop(0, n_strips, body, carry, unroll=True)
    if rem:
        carry = strip_sums(n_strips * STRIP_ROWS, rem, carry)
    return carry


def _dice_partial_kernel(logits_ref, targets_ref, inter_ref, total_ref, *,
                         block_rows, valid_rows_last, n_blocks):
    def write(nrows):
        inter, total = _reduce_rows(logits_ref, targets_ref, nrows)
        inter_ref[...] = inter[None]
        total_ref[...] = total[None]

    if valid_rows_last == block_rows:
        # All blocks are full: no masking, no branching.
        write(block_rows)
    else:
        # Only the last block is partial; gate the shorter (static) reduction
        # on it so the common path stays mask-free.
        is_last = pl.program_id(0) == n_blocks - 1

        @pl.when(jnp.logical_not(is_last))
        def _():
            write(block_rows)

        @pl.when(is_last)
        def _():
            write(valid_rows_last)


def dice_loss_pallas(logits, targets, smooth=1e-6):
    """Scalar dice loss, matching PyTorch DiceLoss.forward semantics."""
    assert logits.shape == targets.shape
    n = int(math.prod(logits.shape))
    assert 0 < n < 2**31

    lf = logits.reshape(-1)
    tf = targets.reshape(-1)

    chunk = SUBLANES * LANES                 # 1024: (8, 128)-alignment quantum
    n_main = (n // chunk) * chunk            # aligned prefix handled by kernel
    rows = n_main // LANES

    inter = jnp.float32(0.0)
    total = jnp.float32(0.0)

    if rows > 0:
        block_rows = min(MAX_BLOCK_ROWS, rows)
        n_blocks = int(pl.cdiv(rows, block_rows))
        valid_rows_last = rows - (n_blocks - 1) * block_rows  # static, mult of 8

        if n_main < n:
            lf_main = jax.lax.slice(lf, (0,), (n_main,))
            tf_main = jax.lax.slice(tf, (0,), (n_main,))
        else:
            lf_main, tf_main = lf, tf
        lf2 = lf_main.reshape(rows, LANES)
        tf2 = tf_main.reshape(rows, LANES)

        kernel = functools.partial(
            _dice_partial_kernel,
            block_rows=block_rows,
            valid_rows_last=valid_rows_last,
            n_blocks=n_blocks,
        )

        inter_parts, total_parts = pl.pallas_call(
            kernel,
            out_shape=(
                jax.ShapeDtypeStruct((n_blocks, 1, LANES), jnp.float32),
                jax.ShapeDtypeStruct((n_blocks, 1, LANES), jnp.float32),
            ),
            grid_spec=pltpu.PrefetchScalarGridSpec(
                num_scalar_prefetch=0,
                grid=(n_blocks,),
                in_specs=[
                    pl.BlockSpec((block_rows, LANES), lambda b: (b, 0)),
                    pl.BlockSpec((block_rows, LANES), lambda b: (b, 0)),
                ],
                out_specs=(
                    pl.BlockSpec((1, 1, LANES), lambda b: (b, 0, 0)),
                    pl.BlockSpec((1, 1, LANES), lambda b: (b, 0, 0)),
                ),
            ),
            compiler_params=pltpu.CompilerParams(
                dimension_semantics=("parallel",),
                vmem_limit_bytes=32 * 1024 * 1024,
            ),
        )(lf2, tf2)

        # Tiny epilogue: combine per-block lane partials.
        inter = inter + jnp.sum(inter_parts)
        total = total + jnp.sum(total_parts)

    if n_main < n:
        # Ragged tail (< 1024 elements): plain JAX, negligible cost, avoids a
        # full-tensor pad/copy on the unaligned path.
        tl = jax.lax.slice(lf, (n_main,), (n,)).astype(jnp.float32)
        tt = jax.lax.slice(tf, (n_main,), (n,)).astype(jnp.float32)
        tp = jax.nn.sigmoid(tl)
        inter = inter + jnp.sum(tp * tt)
        total = total + jnp.sum(tp) + jnp.sum(tt)

    return 1.0 - (2.0 * inter + smooth) / (total + smooth)


def dice_loss_ref(logits, targets, smooth=1e-6):
    p = jax.nn.sigmoid(logits.astype(jnp.float32)).reshape(-1)
    t = targets.astype(jnp.float32).reshape(-1)
    inter = jnp.sum(p * t)
    return 1.0 - (2.0 * inter + smooth) / (jnp.sum(p) + jnp.sum(t) + smooth)


if __name__ == "__main__":
    key = jax.random.PRNGKey(0)
    k1, k2 = jax.random.split(key)

    # (N, C, H, W) as the PyTorch module expects.
    N, C, H, W = 2, 4, 16, 16
    logits = jax.random.normal(k1, (N, C, H, W), dtype=jnp.float32)
    targets = (jax.random.uniform(k2, (N, C, H, W)) > 0.5).astype(jnp.float32)

    loss = jax.jit(dice_loss_pallas)(logits, targets)
    loss = jax.block_until_ready(loss)

    ref = dice_loss_ref(logits, targets)
    assert jnp.allclose(loss, ref, atol=1e-5, rtol=1e-5), (loss, ref)

    print("KERNEL_OK")
</pallas_src>

<mosaic_0001>
module attributes {stable_mosaic.version = 11 : i64} {
  func.func @_dice_partial_kernel(%arg0: i32, %arg1: memref<16x128xf32, #tpu.memory_space<vmem>>, %arg2: memref<16x128xf32, #tpu.memory_space<vmem>>, %arg3: memref<1x1x128xf32, #tpu.memory_space<vmem>>, %arg4: memref<1x1x128xf32, #tpu.memory_space<vmem>>) attributes {dimension_semantics = [#tpu.dimension_semantics<parallel>], iteration_bounds = array<i64: 1>, scalar_prefetch = 0 : i64, scratch_operands = 0 : i64, tpu.core_type = #tpu.core_type<tc>, window_params = [{transform_indices = @transform_0, window_bounds = array<i64: 16, 128>}, {transform_indices = @transform_1, window_bounds = array<i64: 16, 128>}, {transform_indices = @transform_2, window_bounds = array<i64: 1, 1, 128>}, {transform_indices = @transform_3, window_bounds = array<i64: 1, 1, 128>}]} {
    %cst = arith.constant 0.000000e+00 : f32
    %0 = vector.broadcast %cst : f32 to vector<1x128xf32>
    %cst_0 = arith.constant 0.000000e+00 : f32
    %1 = vector.broadcast %cst_0 : f32 to vector<1x128xf32>
    %c0 = arith.constant 0 : index
    %c0_1 = arith.constant 0 : index
    %2 = vector.load %arg1[%c0, %c0_1] : memref<16x128xf32, #tpu.memory_space<vmem>>, vector<16x128xf32>
    %c0_2 = arith.constant 0 : index
    %c0_3 = arith.constant 0 : index
    %3 = vector.load %arg2[%c0_2, %c0_3] : memref<16x128xf32, #tpu.memory_space<vmem>>, vector<16x128xf32>
    %cst_4 = arith.constant 5.000000e-01 : f32
    %4 = vector.broadcast %cst_4 : f32 to vector<16x128xf32>
    %5 = arith.mulf %4, %2 : vector<16x128xf32>
    %6 = math.tanh %5 : vector<16x128xf32>
    %cst_5 = arith.constant 1.000000e+00 : f32
    %7 = vector.broadcast %cst_5 : f32 to vector<16x128xf32>
    %8 = arith.addf %6, %7 : vector<16x128xf32>
    %cst_6 = arith.constant 5.000000e-01 : f32
    %9 = vector.broadcast %cst_6 : f32 to vector<16x128xf32>
    %10 = arith.mulf %9, %8 : vector<16x128xf32>
    %11 = arith.mulf %10, %3 : vector<16x128xf32>
    %cst_7 = arith.constant dense<0.000000e+00> : vector<128xf32>
    %12 = vector.multi_reduction <add>, %11, %cst_7 [0] : vector<16x128xf32> to vector<128xf32>
    %13 = vector.shape_cast %12 : vector<128xf32> to vector<1x128xf32>
    %14 = arith.addf %0, %13 : vector<1x128xf32>
    %15 = arith.addf %10, %3 : vector<16x128xf32>
    %cst_8 = arith.constant dense<0.000000e+00> : vector<128xf32>
    %16 = vector.multi_reduction <add>, %15, %cst_8 [0] : vector<16x128xf32> to vector<128xf32>
    %17 = vector.shape_cast %16 : vector<128xf32> to vector<1x128xf32>
    %18 = arith.addf %1, %17 : vector<1x128xf32>
    %19 = vector.shape_cast %14 : vector<1x128xf32> to vector<1x1x128xf32>
    %c0_9 = arith.constant 0 : index
    %c0_10 = arith.constant 0 : index
    %c0_11 = arith.constant 0 : index
    %20 = vector.load %arg3[%c0_9, %c0_10, %c0_11] : memref<1x1x128xf32, #tpu.memory_space<vmem>>, vector<1x1x128xf32>
    tpu.vector_store %arg3[%c0_9, %c0_10, %c0_11], %19 {strides = array<i32>} : memref<1x1x128xf32, #tpu.memory_space<vmem>>, vector<1x1x128xf32>,
    %21 = vector.shape_cast %18 : vector<1x128xf32> to vector<1x1x128xf32>
    %c0_12 = arith.constant 0 : index
    %c0_13 = arith.constant 0 : index
    %c0_14 = arith.constant 0 : index
    %22 = vector.load %arg4[%c0_12, %c0_13, %c0_14] : memref<1x1x128xf32, #tpu.memory_space<vmem>>, vector<1x1x128xf32>
    tpu.vector_store %arg4[%c0_12, %c0_13, %c0_14], %21 {strides = array<i32>} : memref<1x1x128xf32, #tpu.memory_space<vmem>>, vector<1x1x128xf32>,
    return
  }
  func.func @transform_0(%arg0: i32) -> (i32, i32) {
    %c0_i32 = arith.constant 0 : i32
    %c0_i32_0 = arith.constant 0 : i32
    return %arg0, %c0_i32 : i32, i32
  }
  func.func @transform_1(%arg0: i32) -> (i32, i32) {
    %c0_i32 = arith.constant 0 : i32
    %c0_i32_0 = arith.constant 0 : i32
    return %arg0, %c0_i32 : i32, i32
  }
  func.func @transform_2(%arg0: i32) -> (i32, i32, i32) {
    %c0_i32 = arith.constant 0 : i32
    %c0_i32_0 = arith.constant 0 : i32
    %c0_i32_1 = arith.constant 0 : i32
    return %arg0, %c0_i32, %c0_i32_0 : i32, i32, i32
  }
  func.func @transform_3(%arg0: i32) -> (i32, i32, i32) {
    %c0_i32 = arith.constant 0 : i32
    %c0_i32_0 = arith.constant 0 : i32
    %c0_i32_1 = arith.constant 0 : i32
    return %arg0, %c0_i32, %c0_i32_0 : i32, i32, i32
  }
}

</mosaic_0001>

<llo_original>
// kernel: dice_loss_pallas.1
$region0: #{dice_loss_pallas.1}
  #allocation0 [shape = 'u32[]', space=smem, size = 0x4, offset = 0x4, fixed_abs, tag = 'smem constant byte address 0x4 - core index']
  #allocation1 [shape = 'u32[144,128]{1,0:T(1,128)}', space=vmem, size = 0x12000, scoped, tag = 'internal scratch']
  %s0 = inlined_call_operand.vmem [shape: f32[16,128], index: 0, kind: input, shape index: {}]
  %s1 = inlined_call_operand.vmem [shape: f32[16,128], index: 1, kind: input, shape index: {}]
  %s2 = inlined_call_operand.vmem [shape: f32[1,1,128], index: 2, kind: output, shape index: {0}]
  %s3 = inlined_call_operand.vmem [shape: f32[1,1,128], index: 3, kind: output, shape index: {1}]
  %4 = xla_tuple %s2, %s3
  %s5 = sld [smem:[#allocation0]]
  $region26: #{dice_loss_pallas.1} parent=0
    _
  %s7 = ssub.s32 1, %s5
  %s8 = scalar_select 0, %s7, %s5
  // Predicated region
  $region2: #{dice_loss_pallas.1} parent=0 // pred_check
    _
  $region3: #{dice_loss_pallas.1} parent=0 // pred_check_branch
    %10 = sbr.rel (0) target = $region5
  $region4: #{dice_loss_pallas.1} parent=0 // pred_region
    _
  $region5: #{dice_loss_pallas.1} parent=0 // pred_fallthru
    _
  // Predicated region
  $region6: #{dice_loss_pallas.1} parent=0 // pred_check
    _
  $region7: #{dice_loss_pallas.1} parent=0 // pred_check_branch
    %12 = sbr.rel (0) target = $region9
  $region8: #{dice_loss_pallas.1} parent=0 // pred_region
    _
  $region9: #{dice_loss_pallas.1} parent=0 // pred_fallthru
    _
  %v13 = vld [vmem:[%s0] sm:$0xff]
  %v14 = vld [vmem:[%s0 + $0x8] sm:$0xff]
  %v15 = vld [vmem:[%s1] sm:$0xff]
  %v16 = vld [vmem:[%s1 + $0x8] sm:$0xff]
  %v17 = vmul.f32 %v13, 0.5
  %v18 = vmul.f32 %v14, 0.5
  %v19 = vtanh.pop %v17
  %v20 = vtanh.pop %v18
  %v21 = vadd.f32 %v19, 1.0
  %v22 = vadd.f32 %v20, 1.0
  %v23 = vmul.f32 %v21, 0.5
  %v24 = vmul.f32 %v22, 0.5
  %v25 = vmul.f32 %v23, %v15
  %v26 = vmul.f32 %v24, %v16
  %v27 = vadd.f32 %v25, %v26
  %v28 = vrot.slane %v27, 4
  %v29 = vadd.f32 %v27, %v28
  %v30 = vrot.slane %v29, 2
  %v31 = vadd.f32 %v29, %v30
  %v32 = vrot.slane %v31, 1
  %v33 = vadd.f32 %v31, %v32
  %v34 = vadd.f32 %v33, 0.0
  %v35 = vadd.f32 %v23, %v15
  %v36 = vadd.f32 %v24, %v16
  %v37 = vadd.f32 %v35, %v36
  %v38 = vrot.slane %v37, 4
  %v39 = vadd.f32 %v37, %v38
  %v40 = vrot.slane %v39, 2
  %v41 = vadd.f32 %v39, %v40
  %v42 = vrot.slane %v41, 1
  %v43 = vadd.f32 %v41, %v42
  %v44 = vadd.f32 %v43, 0.0
  %45 = vst [vmem:[%s2] sm:$0x1] %v34
  %46 = vst [vmem:[%s3] sm:$0x1] %v44
  // Predicated region
  $region10: #{dice_loss_pallas.1} parent=0 // pred_check
    _
  $region11: #{dice_loss_pallas.1} parent=0 // pred_check_branch
    %48 = sbr.rel (0) target = $region13
  $region12: #{dice_loss_pallas.1} parent=0 // pred_region
    _
  $region13: #{dice_loss_pallas.1} parent=0 // pred_fallthru
    _
  // Predicated region
  $region14: #{dice_loss_pallas.1} parent=0 // pred_check
    _
  $region15: #{dice_loss_pallas.1} parent=0 // pred_check_branch
    %50 = sbr.rel (0) target = $region17
  $region16: #{dice_loss_pallas.1} parent=0 // pred_region
    _
  $region17: #{dice_loss_pallas.1} parent=0 // pred_fallthru
    _
  // Predicated region
  $region18: #{dice_loss_pallas.1} parent=0 // pred_check
    _
  $region19: #{dice_loss_pallas.1} parent=0 // pred_check_branch
    %52 = sbr.rel (0) target = $region21
  $region20: #{dice_loss_pallas.1} parent=0 // pred_region
    _
  $region21: #{dice_loss_pallas.1} parent=0 // pred_fallthru
    _
  // Predicated region
  $region22: #{dice_loss_pallas.1} parent=0 // pred_check
    _
  $region23: #{dice_loss_pallas.1} parent=0 // pred_check_branch
    %54 = sbr.rel (0) target = $region25
  $region24: #{dice_loss_pallas.1} parent=0 // pred_region
    _
  $region25: #{dice_loss_pallas.1} parent=0 // pred_fallthru
    _

</llo_original>
